<compile_context>
chip_gen: v7x
topology: tpu7x:2x2x1
jax: 0.10.0
libtpu: 0.0.40
codegen_flags: <defaults>
</compile_context>

<pallas_src>
import jax
import jax.numpy as jnp
from jax.experimental import pallas as pl
from jax.experimental.pallas import tpu as pltpu

IMG = 32        # scaled-down analog of DreamSim's Resize(224)/CenterCrop(224)
PATCH = 8       # patch size of the synthetic ViT-style feature extractor
HIDDEN = 64     # patch-embedding width (logical)
EMBED = 32      # final embedding dim used for cosine distance (logical)

NUM_PATCHES = (IMG // PATCH) ** 2     # 16


def _round_up(x, m):
    return -(-x // m) * m


def _dreamsim_kernel(pp_ref, tp_ref, w1_ref, b1_ref, w2_ref, loss_ref):
    """pp/tp: (TB, P, Dp) bf16 patchified images; loss: (TB, 1) f32.

    All lane dims (Dp, Hp, Ep) are zero-padded to multiples of 128 by the
    wrapper, so every matmul / load / store is lane-dense; the zero padding is
    numerically exact (zero K columns, zero hidden/embedding columns that do
    not change mean-pool, the norms or the cosine).
    """
    TB, P, Dp = pp_ref.shape
    Hp = w1_ref.shape[1]

    # Fuse pred/target into one pass: one (2*TB*P, Dp) x (Dp, Hp) matmul
    # instead of two half-size ones -> better MXU fill, single GELU / pool /
    # normalize sequence.
    x = jnp.concatenate(
        [pp_ref[...].reshape(TB * P, Dp), tp_ref[...].reshape(TB * P, Dp)],
        axis=0)                                               # (2*TB*P, Dp) bf16

    # bf16 MXU operands with f32 accumulation; elementwise epilogue stays f32
    # (v5e's VPU/EUP have no bf16 path).
    h = jnp.dot(x, w1_ref[...], preferred_element_type=jnp.float32)
    h = h + b1_ref[...]                                       # (2*TB*P, Hp) f32
    # tanh-form GELU -> EUP transcendental slot (free vs the VALU slots).
    # TODO(synk): PyTorch nn.GELU defaults to exact erf; tanh approx chosen for EUP.
    h = jax.nn.gelu(h, approximate=True)

    pooled = jnp.mean(h.reshape(2 * TB, P, Hp), axis=1)        # (2*TB, Hp)  XLU reduce
    e = jnp.dot(pooled.astype(jnp.bfloat16), w2_ref[...],
                preferred_element_type=jnp.float32)            # (2*TB, Ep)  MXU

    # L2 normalize + cosine.  rsqrt(max(sumsq, eps^2)) == 1 / max(||e||, eps);
    # PyTorch's F.cosine_similarity clamps the product of norms instead, which
    # differs only for near-zero embeddings.
    sumsq = jnp.sum(e * e, axis=-1, keepdims=True)
    en = e * jax.lax.rsqrt(jnp.maximum(sumsq, 1e-16))          # EUP rsqrt

    ep, et = en[:TB], en[TB:]
    cos = jnp.sum(ep * et, axis=-1, keepdims=True)             # (TB, 1)
    loss_ref[...] = 1.0 - cos


def _preprocess(x):
    """((x+1)/2) -> Resize(IMG, bicubic, short side) -> CenterCrop(IMG) -> patchify."""
    x = (x + 1.0) / 2.0
    b, c, h, w = x.shape
    scale = IMG / min(h, w)
    nh, nw = int(round(h * scale)), int(round(w * scale))
    x = jax.image.resize(x, (b, c, nh, nw), method="bicubic")
    top, left = (nh - IMG) // 2, (nw - IMG) // 2
    x = x[:, :, top:top + IMG, left:left + IMG]
    # patchify: NCHW -> NHWC -> (B, P, C*p*p)
    p = PATCH
    x = x.transpose(0, 2, 3, 1)
    x = x.reshape(b, IMG // p, p, IMG // p, p, c)
    x = x.transpose(0, 1, 3, 2, 4, 5)
    x = x.reshape(b, (IMG // p) ** 2, p * p * c)
    return x.astype(jnp.float32)


def _pick_batch_tile(B):
    """Batch tile: multiple of 8 so the (TB, 1) output block is sublane-aligned.

    Sized so 2 inputs x 2 pipeline buffers x TB*P*Dp bf16 stays ~<= 2 MiB, far
    inside v7x's 32 MiB default scoped VMEM (64 MiB physical); v5e/v6e
    (128 MiB) have even more headroom.  Prefer >= 2 grid steps so the
    "parallel" batch axis can be sharded across v7x's two TensorCores.
    """
    tb = 64
    while tb > 8 and pl.cdiv(B, tb) < 2:
        tb //= 2
    return tb


@jax.jit
def dreamsim_feature_loss(pred, target, w1, b1, w2):
    pp = _preprocess(pred)                    # (B, P, D) f32
    tp = _preprocess(target)
    B, P, D = pp.shape
    H, E = w1.shape[1], w2.shape[1]

    # Lane-dense padded dims (zero padding is numerically exact here).
    Dp = _round_up(D, 128)                    # 192 -> 256
    Hp = _round_up(H, 128)                    # 64  -> 128
    Ep = _round_up(E, 128)                    # 32  -> 128

    TB = _pick_batch_tile(B)
    Bp = pl.cdiv(B, TB) * TB

    def pad_patches(x):
        x = jnp.pad(x, ((0, Bp - B), (0, 0), (0, Dp - D)))
        return x.astype(jnp.bfloat16)         # bf16 MXU operand, halves input DMA

    ppp, tpp = pad_patches(pp), pad_patches(tp)
    w1p = jnp.pad(w1, ((0, Dp - D), (0, Hp - H))).astype(jnp.bfloat16)
    b1p = jnp.pad(b1, ((0, 0), (0, Hp - H))).astype(jnp.float32)
    w2p = jnp.pad(w2, ((0, Hp - H), (0, Ep - E))).astype(jnp.bfloat16)

    loss = pl.pallas_call(
        _dreamsim_kernel,
        out_shape=jax.ShapeDtypeStruct((Bp, 1), jnp.float32),
        grid_spec=pltpu.PrefetchScalarGridSpec(
            num_scalar_prefetch=0,
            grid=(Bp // TB,),
            in_specs=[
                pl.BlockSpec((TB, P, Dp), lambda b: (b, 0, 0)),   # pred patches
                pl.BlockSpec((TB, P, Dp), lambda b: (b, 0, 0)),   # target patches
                pl.BlockSpec((Dp, Hp), lambda b: (0, 0)),         # w1 (resident)
                pl.BlockSpec((1, Hp), lambda b: (0, 0)),          # b1 (resident)
                pl.BlockSpec((Hp, Ep), lambda b: (0, 0)),         # w2 (resident)
            ],
            out_specs=pl.BlockSpec((TB, 1), lambda b: (b, 0)),
        ),
        compiler_params=pltpu.CompilerParams(
            dimension_semantics=("parallel",),   # batch axis: megacore-shardable
        ),
    )(ppp, tpp, w1p, b1p, w2p)

    return loss[:B, 0]        # dreamsim returns a per-pair distance of shape (B,)


if __name__ == "__main__":
    key = jax.random.PRNGKey(0)
    k_pred, k_tgt, k_w1, k_w2 = jax.random.split(key, 4)

    B, C, S = 2, 3, 16                      # small NCHW inputs in [-1, 1]
    pred = jax.random.uniform(k_pred, (B, C, S, S), jnp.float32, -1.0, 1.0)
    target = jax.random.uniform(k_tgt, (B, C, S, S), jnp.float32, -1.0, 1.0)

    D = C * PATCH * PATCH
    w1 = jax.random.normal(k_w1, (D, HIDDEN), jnp.float32) * (1.0 / jnp.sqrt(D))
    b1 = jnp.zeros((1, HIDDEN), jnp.float32)
    w2 = jax.random.normal(k_w2, (HIDDEN, EMBED), jnp.float32) * (1.0 / jnp.sqrt(HIDDEN))

    loss = dreamsim_feature_loss(pred, target, w1, b1, w2)
    jax.block_until_ready(loss)

    assert loss.shape == (B,)
    assert bool(jnp.all(jnp.isfinite(loss)))
    print("KERNEL_OK")
</pallas_src>

<mosaic_0001>
module attributes {stable_mosaic.version = 11 : i64} {
  func.func @_dreamsim_kernel(%arg0: i32, %arg1: memref<8x16x256xbf16, #tpu.memory_space<vmem>>, %arg2: memref<8x16x256xbf16, #tpu.memory_space<vmem>>, %arg3: memref<256x128xbf16, #tpu.memory_space<vmem>>, %arg4: memref<1x128xf32, #tpu.memory_space<vmem>>, %arg5: memref<128x128xbf16, #tpu.memory_space<vmem>>, %arg6: memref<8x1xf32, #tpu.memory_space<vmem>>) attributes {dimension_semantics = [#tpu.dimension_semantics<parallel>], iteration_bounds = array<i64: 1>, scalar_prefetch = 0 : i64, scratch_operands = 0 : i64, tpu.core_type = #tpu.core_type<tc>, window_params = [{transform_indices = @transform_0, window_bounds = array<i64: 8, 16, 256>}, {transform_indices = @transform_1, window_bounds = array<i64: 8, 16, 256>}, {pipeline_mode = #tpu.pipeline_mode<synchronous>, transform_indices = @transform_2, window_bounds = array<i64: 256, 128>}, {pipeline_mode = #tpu.pipeline_mode<synchronous>, transform_indices = @transform_3, window_bounds = array<i64: 1, 128>}, {pipeline_mode = #tpu.pipeline_mode<synchronous>, transform_indices = @transform_4, window_bounds = array<i64: 128, 128>}, {transform_indices = @transform_5, window_bounds = array<i64: 8, 1>}]} {
    %c0 = arith.constant 0 : index
    %c0_0 = arith.constant 0 : index
    %c0_1 = arith.constant 0 : index
    %0 = vector.load %arg1[%c0, %c0_0, %c0_1] : memref<8x16x256xbf16, #tpu.memory_space<vmem>>, vector<8x16x256xbf16>
    %1 = vector.shape_cast %0 : vector<8x16x256xbf16> to vector<128x256xbf16>
    %c0_2 = arith.constant 0 : index
    %c0_3 = arith.constant 0 : index
    %c0_4 = arith.constant 0 : index
    %2 = vector.load %arg2[%c0_2, %c0_3, %c0_4] : memref<8x16x256xbf16, #tpu.memory_space<vmem>>, vector<8x16x256xbf16>
    %3 = vector.shape_cast %2 : vector<8x16x256xbf16> to vector<128x256xbf16>
    %4 = tpu.concatenate %1, %3 in 0 : vector<128x256xbf16>, vector<128x256xbf16> -> vector<256x256xbf16>
    %c0_5 = arith.constant 0 : index
    %c0_6 = arith.constant 0 : index
    %5 = vector.load %arg3[%c0_5, %c0_6] : memref<256x128xbf16, #tpu.memory_space<vmem>>, vector<256x128xbf16>
    %cst = arith.constant dense<0.000000e+00> : vector<256x128xf32>
    %6 = tpu.matmul %4, %5, %cst {dimension_numbers = #tpu.dot_dimension_numbers<[1], [0], [0], [1], [0, 0, 1, 1], [], []>} : vector<256x256xbf16>, vector<256x128xbf16>, vector<256x128xf32> -> vector<256x128xf32>
    %c0_7 = arith.constant 0 : index
    %c0_8 = arith.constant 0 : index
    %7 = vector.load %arg4[%c0_7, %c0_8] : memref<1x128xf32, #tpu.memory_space<vmem>>, vector<1x128xf32>
    %8 = vector.broadcast %7 : vector<1x128xf32> to vector<256x128xf32>
    %9 = arith.addf %6, %8 : vector<256x128xf32>
    %10 = arith.mulf %9, %9 : vector<256x128xf32>
    %11 = arith.mulf %9, %10 : vector<256x128xf32>
    %cst_9 = arith.constant 4.471500e-02 : f32
    %12 = vector.broadcast %cst_9 : f32 to vector<256x128xf32>
    %13 = arith.mulf %12, %11 : vector<256x128xf32>
    %14 = arith.addf %9, %13 : vector<256x128xf32>
    %cst_10 = arith.constant 0.797884583 : f32
    %15 = vector.broadcast %cst_10 : f32 to vector<256x128xf32>
    %16 = arith.mulf %15, %14 : vector<256x128xf32>
    %17 = math.tanh %16 : vector<256x128xf32>
    %cst_11 = arith.constant 1.000000e+00 : f32
    %18 = vector.broadcast %cst_11 : f32 to vector<256x128xf32>
    %19 = arith.addf %18, %17 : vector<256x128xf32>
    %cst_12 = arith.constant 5.000000e-01 : f32
    %20 = vector.broadcast %cst_12 : f32 to vector<256x128xf32>
    %21 = arith.mulf %20, %19 : vector<256x128xf32>
    %22 = arith.mulf %9, %21 : vector<256x128xf32>
    %23 = vector.shape_cast %22 : vector<256x128xf32> to vector<16x16x128xf32>
    %cst_13 = arith.constant dense<0.000000e+00> : vector<16x128xf32>
    %24 = vector.multi_reduction <add>, %23, %cst_13 [1] : vector<16x16x128xf32> to vector<16x128xf32>
    %cst_14 = arith.constant 1.600000e+01 : f32
    %25 = vector.broadcast %cst_14 : f32 to vector<16x128xf32>
    %26 = arith.divf %24, %25 : vector<16x128xf32>
    %27 = arith.truncf %26 : vector<16x128xf32> to vector<16x128xbf16>
    %c0_15 = arith.constant 0 : index
    %c0_16 = arith.constant 0 : index
    %28 = vector.load %arg5[%c0_15, %c0_16] : memref<128x128xbf16, #tpu.memory_space<vmem>>, vector<128x128xbf16>
    %cst_17 = arith.constant dense<0.000000e+00> : vector<16x128xf32>
    %29 = tpu.matmul %27, %28, %cst_17 {dimension_numbers = #tpu.dot_dimension_numbers<[1], [0], [0], [1], [0, 0, 1, 1], [], []>} : vector<16x128xbf16>, vector<128x128xbf16>, vector<16x128xf32> -> vector<16x128xf32>
    %30 = arith.mulf %29, %29 : vector<16x128xf32>
    %cst_18 = arith.constant dense<0.000000e+00> : vector<16xf32>
    %31 = vector.multi_reduction <add>, %30, %cst_18 [1] : vector<16x128xf32> to vector<16xf32>
    %32 = vector.shape_cast %31 : vector<16xf32> to vector<16x1xf32>
    %cst_19 = arith.constant 1.000000e-16 : f32
    %33 = vector.broadcast %cst_19 : f32 to vector<16x1xf32>
    %34 = arith.maximumf %32, %33 : vector<16x1xf32>
    %35 = math.rsqrt %34 : vector<16x1xf32>
    %36 = vector.broadcast %35 : vector<16x1xf32> to vector<16x128xf32>
    %37 = arith.mulf %29, %36 : vector<16x128xf32>
    %38 = vector.extract_strided_slice %37 {offsets = [0, 0], sizes = [8, 128], strides = [1, 1]} : vector<16x128xf32> to vector<8x128xf32>
    %39 = vector.extract_strided_slice %37 {offsets = [8, 0], sizes = [8, 128], strides = [1, 1]} : vector<16x128xf32> to vector<8x128xf32>
    %40 = arith.mulf %38, %39 : vector<8x128xf32>
    %cst_20 = arith.constant dense<0.000000e+00> : vector<8xf32>
    %41 = vector.multi_reduction <add>, %40, %cst_20 [1] : vector<8x128xf32> to vector<8xf32>
    %42 = vector.shape_cast %41 : vector<8xf32> to vector<8x1xf32>
    %cst_21 = arith.constant 1.000000e+00 : f32
    %43 = vector.broadcast %cst_21 : f32 to vector<8x1xf32>
    %44 = arith.subf %43, %42 : vector<8x1xf32>
    %c0_22 = arith.constant 0 : index
    %c0_23 = arith.constant 0 : index
    %45 = vector.load %arg6[%c0_22, %c0_23] : memref<8x1xf32, #tpu.memory_space<vmem>>, vector<8x1xf32>
    tpu.vector_store %arg6[%c0_22, %c0_23], %44 {strides = array<i32>} : memref<8x1xf32, #tpu.memory_space<vmem>>, vector<8x1xf32>,
    return
  }
  func.func @transform_0(%arg0: i32) -> (i32, i32, i32) {
    %c0_i32 = arith.constant 0 : i32
    %c0_i32_0 = arith.constant 0 : i32
    %c0_i32_1 = arith.constant 0 : i32
    return %arg0, %c0_i32, %c0_i32_0 : i32, i32, i32
  }
  func.func @transform_1(%arg0: i32) -> (i32, i32, i32) {
    %c0_i32 = arith.constant 0 : i32
    %c0_i32_0 = arith.constant 0 : i32
    %c0_i32_1 = arith.constant 0 : i32
    return %arg0, %c0_i32, %c0_i32_0 : i32, i32, i32
  }
  func.func @transform_2(%arg0: i32) -> (i32, i32) {
    %c0_i32 = arith.constant 0 : i32
    %c0_i32_0 = arith.constant 0 : i32
    %c0_i32_1 = arith.constant 0 : i32
    return %c0_i32, %c0_i32_0 : i32, i32
  }
  func.func @transform_3(%arg0: i32) -> (i32, i32) {
    %c0_i32 = arith.constant 0 : i32
    %c0_i32_0 = arith.constant 0 : i32
    %c0_i32_1 = arith.constant 0 : i32
    return %c0_i32, %c0_i32_0 : i32, i32
  }
  func.func @transform_4(%arg0: i32) -> (i32, i32) {
    %c0_i32 = arith.constant 0 : i32
    %c0_i32_0 = arith.constant 0 : i32
    %c0_i32_1 = arith.constant 0 : i32
    return %c0_i32, %c0_i32_0 : i32, i32
  }
  func.func @transform_5(%arg0: i32) -> (i32, i32) {
    %c0_i32 = arith.constant 0 : i32
    %c0_i32_0 = arith.constant 0 : i32
    return %arg0, %c0_i32 : i32, i32
  }
}

</mosaic_0001>

<llo_original>
// kernel: dreamsim_feature_loss.1
$region0: #{dreamsim_feature_loss.1}
  #allocation0 [shape = 'u32[]', space=smem, size = 0x4, offset = 0x4, fixed_abs, tag = 'smem constant byte address 0x4 - core index']
  #allocation1 [shape = 'u32[144,128]{1,0:T(1,128)}', space=vmem, size = 0x12000, scoped, tag = 'internal scratch']
  %s0 = inlined_call_operand.vmem [shape: bf16[8,16,256], index: 0, kind: input, shape index: {}]
  %s1 = inlined_call_operand.vmem [shape: bf16[8,16,256], index: 1, kind: input, shape index: {}]
  %s2 = inlined_call_operand.vmem [shape: bf16[256,128], index: 2, kind: input, shape index: {}]
  %s3 = inlined_call_operand.vmem [shape: f32[1,128], index: 3, kind: input, shape index: {}]
  %s4 = inlined_call_operand.vmem [shape: bf16[128,128], index: 4, kind: input, shape index: {}]
  %s5 = inlined_call_operand.vmem [shape: f32[8,1], index: 5, kind: output, shape index: {}]
  %s6 = sld [smem:[#allocation0]]
  $region30: #{dreamsim_feature_loss.1} parent=0
    _
  %s8 = ssub.s32 1, %s6
  %s9 = scalar_select 0, %s8, %s6
  // Predicated region
  $region2: #{dreamsim_feature_loss.1} parent=0 // pred_check
    _
  $region3: #{dreamsim_feature_loss.1} parent=0 // pred_check_branch
    %11 = sbr.rel (0) target = $region5
  $region4: #{dreamsim_feature_loss.1} parent=0 // pred_region
    _
  $region5: #{dreamsim_feature_loss.1} parent=0 // pred_fallthru
    _
  // Predicated region
  $region6: #{dreamsim_feature_loss.1} parent=0 // pred_check
    _
  $region7: #{dreamsim_feature_loss.1} parent=0 // pred_check_branch
    %13 = sbr.rel (0) target = $region9
  $region8: #{dreamsim_feature_loss.1} parent=0 // pred_region
    _
  $region9: #{dreamsim_feature_loss.1} parent=0 // pred_fallthru
    _
  // Predicated region
  $region10: #{dreamsim_feature_loss.1} parent=0 // pred_check
    _
  $region11: #{dreamsim_feature_loss.1} parent=0 // pred_check_branch
    %15 = sbr.rel (0) target = $region13
  $region12: #{dreamsim_feature_loss.1} parent=0 // pred_region
    _
  $region13: #{dreamsim_feature_loss.1} parent=0 // pred_fallthru
    _
  // Predicated region
  $region14: #{dreamsim_feature_loss.1} parent=0 // pred_check
    _
  $region15: #{dreamsim_feature_loss.1} parent=0 // pred_check_branch
    %17 = sbr.rel (0) target = $region17
  $region16: #{dreamsim_feature_loss.1} parent=0 // pred_region
    _
  $region17: #{dreamsim_feature_loss.1} parent=0 // pred_fallthru
    _
  // Predicated region
  $region18: #{dreamsim_feature_loss.1} parent=0 // pred_check
    _
  $region19: #{dreamsim_feature_loss.1} parent=0 // pred_check_branch
    %19 = sbr.rel (0) target = $region21
  $region20: #{dreamsim_feature_loss.1} parent=0 // pred_region
    _
  $region21: #{dreamsim_feature_loss.1} parent=0 // pred_fallthru
    _
  %v21 = vld [vmem:[%s0] sm:$0xff]
  %v22 = vld [vmem:[%s0 + $0x8] sm:$0xff]
  %v23 = vld [vmem:[%s0 + $0x10] sm:$0xff]
  %v24 = vld [vmem:[%s0 + $0x18] sm:$0xff]
  %v25 = vld [vmem:[%s0 + $0x20] sm:$0xff]
  %v26 = vld [vmem:[%s0 + $0x28] sm:$0xff]
  %v27 = vld [vmem:[%s0 + $0x30] sm:$0xff]
  %v28 = vld [vmem:[%s0 + $0x38] sm:$0xff]
  %v29 = vld [vmem:[%s0 + $0x40] sm:$0xff]
  %v30 = vld [vmem:[%s0 + $0x48] sm:$0xff]
  %v31 = vld [vmem:[%s0 + $0x50] sm:$0xff]
  %v32 = vld [vmem:[%s0 + $0x58] sm:$0xff]
  %v33 = vld [vmem:[%s0 + $0x60] sm:$0xff]
  %v34 = vld [vmem:[%s0 + $0x68] sm:$0xff]
  %v35 = vld [vmem:[%s0 + $0x70] sm:$0xff]
  %v36 = vld [vmem:[%s0 + $0x78] sm:$0xff]
  %v37 = vld [vmem:[%s1] sm:$0xff]
  %v38 = vld [vmem:[%s1 + $0x8] sm:$0xff]
  %v39 = vld [vmem:[%s1 + $0x10] sm:$0xff]
  %v40 = vld [vmem:[%s1 + $0x18] sm:$0xff]
  %v41 = vld [vmem:[%s1 + $0x20] sm:$0xff]
  %v42 = vld [vmem:[%s1 + $0x28] sm:$0xff]
  %v43 = vld [vmem:[%s1 + $0x30] sm:$0xff]
  %v44 = vld [vmem:[%s1 + $0x38] sm:$0xff]
  %v45 = vld [vmem:[%s1 + $0x40] sm:$0xff]
  %v46 = vld [vmem:[%s1 + $0x48] sm:$0xff]
  %v47 = vld [vmem:[%s1 + $0x50] sm:$0xff]
  %v48 = vld [vmem:[%s1 + $0x58] sm:$0xff]
  %v49 = vld [vmem:[%s1 + $0x60] sm:$0xff]
  %v50 = vld [vmem:[%s1 + $0x68] sm:$0xff]
  %v51 = vld [vmem:[%s1 + $0x70] sm:$0xff]
  %v52 = vld [vmem:[%s1 + $0x78] sm:$0xff]
  %v69 = vunpack.c.l.b16 %v21
  %v70 = vunpack.c.h.b16 %v21
  %v71 = vunpack.c.l.b16 %v22
  %v72 = vunpack.c.h.b16 %v22
  %v73 = vunpack.c.l.b16 %v23
  %v74 = vunpack.c.h.b16 %v23
  %v75 = vunpack.c.l.b16 %v24
  %v76 = vunpack.c.h.b16 %v24
  %v77 = vunpack.c.l.b16 %v25
  %v78 = vunpack.c.h.b16 %v25
  %v79 = vunpack.c.l.b16 %v26
  %v80 = vunpack.c.h.b16 %v26
  %v81 = vunpack.c.l.b16 %v27
  %v82 = vunpack.c.h.b16 %v27
  %v83 = vunpack.c.l.b16 %v28
  %v84 = vunpack.c.h.b16 %v28
  %v85 = vunpack.c.l.b16 %v29
  %v86 = vunpack.c.h.b16 %v29
  %v87 = vunpack.c.l.b16 %v30
  %v88 = vunpack.c.h.b16 %v30
  %v89 = vunpack.c.l.b16 %v31
  %v90 = vunpack.c.h.b16 %v31
  %v91 = vunpack.c.l.b16 %v32
  %v92 = vunpack.c.h.b16 %v32
  %v93 = vunpack.c.l.b16 %v33
  %v94 = vunpack.c.h.b16 %v33
  %v95 = vunpack.c.l.b16 %v34
  %v96 = vunpack.c.h.b16 %v34
  %v97 = vunpack.c.l.b16 %v35
  %v98 = vunpack.c.h.b16 %v35
  %v99 = vunpack.c.l.b16 %v36
  %v100 = vunpack.c.h.b16 %v36
  %v101 = vpack.c.b16 %v71, %v69
  %v102 = vpack.c.b16 %v72, %v70
  %v103 = vpack.c.b16 %v75, %v73
  %v104 = vpack.c.b16 %v76, %v74
  %v105 = vpack.c.b16 %v79, %v77
  %v106 = vpack.c.b16 %v80, %v78
  %v107 = vpack.c.b16 %v83, %v81
  %v108 = vpack.c.b16 %v84, %v82
  %v109 = vpack.c.b16 %v87, %v85
  %v110 = vpack.c.b16 %v88, %v86
  %v111 = vpack.c.b16 %v91, %v89
  %v112 = vpack.c.b16 %v92, %v90
  %v113 = vpack.c.b16 %v95, %v93
  %v114 = vpack.c.b16 %v96, %v94
  %v115 = vpack.c.b16 %v99, %v97
  %v116 = vpack.c.b16 %v100, %v98
  %v149 = vunpack.c.l.b16 %v37
  %v150 = vunpack.c.h.b16 %v37
  %v151 = vunpack.c.l.b16 %v38
  %v152 = vunpack.c.h.b16 %v38
  %v153 = vunpack.c.l.b16 %v39
  %v154 = vunpack.c.h.b16 %v39
  %v155 = vunpack.c.l.b16 %v40
  %v156 = vunpack.c.h.b16 %v40
  %v157 = vunpack.c.l.b16 %v41
  %v158 = vunpack.c.h.b16 %v41
  %v159 = vunpack.c.l.b16 %v42
  %v160 = vunpack.c.h.b16 %v42
  %v161 = vunpack.c.l.b16 %v43
  %v162 = vunpack.c.h.b16 %v43
  %v163 = vunpack.c.l.b16 %v44
  %v164 = vunpack.c.h.b16 %v44
  %v165 = vunpack.c.l.b16 %v45
  %v166 = vunpack.c.h.b16 %v45
  %v167 = vunpack.c.l.b16 %v46
  %v168 = vunpack.c.h.b16 %v46
  %v169 = vunpack.c.l.b16 %v47
  %v170 = vunpack.c.h.b16 %v47
  %v171 = vunpack.c.l.b16 %v48
  %v172 = vunpack.c.h.b16 %v48
  %v173 = vunpack.c.l.b16 %v49
  %v174 = vunpack.c.h.b16 %v49
  %v175 = vunpack.c.l.b16 %v50
  %v176 = vunpack.c.h.b16 %v50
  %v177 = vunpack.c.l.b16 %v51
  %v178 = vunpack.c.h.b16 %v51
  %v179 = vunpack.c.l.b16 %v52
  %v180 = vunpack.c.h.b16 %v52
  %v181 = vpack.c.b16 %v151, %v149
  %v182 = vpack.c.b16 %v152, %v150
  %v183 = vpack.c.b16 %v155, %v153
  %v184 = vpack.c.b16 %v156, %v154
  %v185 = vpack.c.b16 %v159, %v157
  %v186 = vpack.c.b16 %v160, %v158
  %v187 = vpack.c.b16 %v163, %v161
  %v188 = vpack.c.b16 %v164, %v162
  %v189 = vpack.c.b16 %v167, %v165
  %v190 = vpack.c.b16 %v168, %v166
  %v191 = vpack.c.b16 %v171, %v169
  %v192 = vpack.c.b16 %v172, %v170
  %v193 = vpack.c.b16 %v175, %v173
  %v194 = vpack.c.b16 %v176, %v174
  %v195 = vpack.c.b16 %v179, %v177
  %v196 = vpack.c.b16 %v180, %v178
  %v213 = vld [vmem:[%s2] sm:$0xf]
  %v214 = vld [vmem:[%s2 + $0x4] sm:$0xf]
  %v215 = vld [vmem:[%s2 + $0x8] sm:$0xf]
  %v216 = vld [vmem:[%s2 + $0xc] sm:$0xf]
  %v217 = vld [vmem:[%s2 + $0x10] sm:$0xf]
  %v218 = vld [vmem:[%s2 + $0x14] sm:$0xf]
  %v219 = vld [vmem:[%s2 + $0x18] sm:$0xf]
  %v220 = vld [vmem:[%s2 + $0x1c] sm:$0xf]
  %v221 = vld [vmem:[%s2 + $0x20] sm:$0xf]
  %v222 = vld [vmem:[%s2 + $0x24] sm:$0xf]
  %v223 = vld [vmem:[%s2 + $0x28] sm:$0xf]
  %v224 = vld [vmem:[%s2 + $0x2c] sm:$0xf]
  %v225 = vld [vmem:[%s2 + $0x30] sm:$0xf]
  %v226 = vld [vmem:[%s2 + $0x34] sm:$0xf]
  %v227 = vld [vmem:[%s2 + $0x38] sm:$0xf]
  %v228 = vld [vmem:[%s2 + $0x3c] sm:$0xf]
  %v229 = vld [vmem:[%s2 + $0x40] sm:$0xf]
  %v230 = vld [vmem:[%s2 + $0x44] sm:$0xf]
  %v231 = vld [vmem:[%s2 + $0x48] sm:$0xf]
  %v232 = vld [vmem:[%s2 + $0x4c] sm:$0xf]
  %v233 = vld [vmem:[%s2 + $0x50] sm:$0xf]
  %v234 = vld [vmem:[%s2 + $0x54] sm:$0xf]
  %v235 = vld [vmem:[%s2 + $0x58] sm:$0xf]
  %v236 = vld [vmem:[%s2 + $0x5c] sm:$0xf]
  %v237 = vld [vmem:[%s2 + $0x60] sm:$0xf]
  %v238 = vld [vmem:[%s2 + $0x64] sm:$0xf]
  %v239 = vld [vmem:[%s2 + $0x68] sm:$0xf]
  %v240 = vld [vmem:[%s2 + $0x6c] sm:$0xf]
  %v241 = vld [vmem:[%s2 + $0x70] sm:$0xf]
  %v242 = vld [vmem:[%s2 + $0x74] sm:$0xf]
  %v243 = vld [vmem:[%s2 + $0x78] sm:$0xf]
  %v244 = vld [vmem:[%s2 + $0x7c] sm:$0xf]
  %v245 = vld [vmem:[%s3] sm:$0x1]
  %v247 = vlaneseq
  %v248 = vshrl.u32 %v247, 7
  %v249 = vsub.s32 0, %v248
  %v250 = vrot.slane %v245, %v249
  %v284 = vunpack.c.l.b16 %v213
  %v285 = vunpack.c.l.b16 %v214
  %v286 = vunpack.c.l.b16 %v215
  %v287 = vunpack.c.l.b16 %v216
  %v288 = vunpack.c.l.b16 %v217
  %v289 = vunpack.c.l.b16 %v218
  %v290 = vunpack.c.l.b16 %v219
  %v291 = vunpack.c.l.b16 %v220
  %v292 = vunpack.c.l.b16 %v221
  %v293 = vunpack.c.l.b16 %v222
  %v294 = vunpack.c.l.b16 %v223
  %v295 = vunpack.c.l.b16 %v224
  %v296 = vunpack.c.l.b16 %v225
  %v297 = vunpack.c.l.b16 %v226
  %v298 = vunpack.c.l.b16 %v227
  %v299 = vunpack.c.l.b16 %v228
  %v300 = vunpack.c.l.b16 %v229
  %v301 = vunpack.c.l.b16 %v230
  %v302 = vunpack.c.l.b16 %v231
  %v303 = vunpack.c.l.b16 %v232
  %v304 = vunpack.c.l.b16 %v233
  %v305 = vunpack.c.l.b16 %v234
  %v306 = vunpack.c.l.b16 %v235
  %v307 = vunpack.c.l.b16 %v236
  %v308 = vunpack.c.l.b16 %v237
  %v309 = vunpack.c.l.b16 %v238
  %v310 = vunpack.c.l.b16 %v239
  %v311 = vunpack.c.l.b16 %v240
  %v312 = vunpack.c.l.b16 %v241
  %v313 = vunpack.c.l.b16 %v242
  %v314 = vunpack.c.l.b16 %v243
  %v315 = vunpack.c.l.b16 %v244
  %v316 = vpack.c.b16 %v285, %v284
  %v317 = vpack.c.b16 %v287, %v286
  %v318 = vpack.c.b16 %v289, %v288
  %v319 = vpack.c.b16 %v291, %v290
  %v320 = vpack.c.b16 %v293, %v292
  %v321 = vpack.c.b16 %v295, %v294
  %v322 = vpack.c.b16 %v297, %v296
  %v323 = vpack.c.b16 %v299, %v298
  %v324 = vpack.c.b16 %v301, %v300
  %v325 = vpack.c.b16 %v303, %v302
  %v326 = vpack.c.b16 %v305, %v304
  %v327 = vpack.c.b16 %v307, %v306
  %v328 = vpack.c.b16 %v309, %v308
  %v329 = vpack.c.b16 %v311, %v310
  %v330 = vpack.c.b16 %v313, %v312
  %v331 = vpack.c.b16 %v315, %v314
  %348 = vmatprep.subr.bf16.mxu0 0
  %349 = vmatpush1.bf16.msra.mxu0 %v316
  %350 = vmatprep.subr.bf16.mxu0 0
  %351 = vmatpush1.bf16.msra.mxu0 %v317
  %352 = vmatprep.subr.bf16.mxu0 0
  %353 = vmatpush1.bf16.msra.mxu0 %v318
  %354 = vmatprep.subr.bf16.mxu0 0
  %355 = vmatpush1.bf16.msra.mxu0 %v319
  %356 = vmatprep.subr.bf16.mxu0 0
  %357 = vmatpush1.bf16.msra.mxu0 %v320
  %358 = vmatprep.subr.bf16.mxu0 0
  %359 = vmatpush1.bf16.msra.mxu0 %v321
  %360 = vmatprep.subr.bf16.mxu0 0
  %361 = vmatpush1.bf16.msra.mxu0 %v322
  %362 = vmatprep.subr.bf16.mxu0 0
  %363 = vmatpush1.bf16.msra.mxu0 %v323
  %364 = vmatprep.subr.bf16.mxu0 0
  %365 = vmatpush1.bf16.msra.mxu0 %v324
  %366 = vmatprep.subr.bf16.mxu0 0
  %367 = vmatpush1.bf16.msra.mxu0 %v325
  %368 = vmatprep.subr.bf16.mxu0 0
  %369 = vmatpush1.bf16.msra.mxu0 %v326
  %370 = vmatprep.subr.bf16.mxu0 0
  %371 = vmatpush1.bf16.msra.mxu0 %v327
  %372 = vmatprep.subr.bf16.mxu0 0
  %373 = vmatpush1.bf16.msra.mxu0 %v328
  %374 = vmatprep.subr.bf16.mxu0 0
  %375 = vmatpush1.bf16.msra.mxu0 %v329
  %376 = vmatprep.subr.bf16.mxu0 0
  %377 = vmatpush1.bf16.msra.mxu0 %v330
  %378 = vmatprep.subr.bf16.mxu0 0
  %379 = vmatpush1.bf16.msra.mxu0 %v331
  %380 = vmatprep.mubr.bf16.mxu0 %v102
  %381 = vmatmul.mubr.bf16.gmra.mrb[0].mxu0 %v101
  %v382 = vpop.f32.mrb[0].mxu0
  %v383 = vadd.f32 %v250, %v382
  %v384 = vpop.f32.mrb[0].mxu0
  %v385 = vpop.f32.mrb[0].mxu0
  %v386 = vadd.f32 %v250, %v385
  %v387 = vpop.f32.mrb[0].mxu0
  %388 = vmatprep.mubr.bf16.mxu0 %v104
  %389 = vmatmul.mubr.bf16.gmra.mrb[0].mxu0 %v103
  %v390 = vpop.f32.mrb[0].mxu0
  %v391 = vadd.f32 %v250, %v390
  %v392 = vpop.f32.mrb[0].mxu0
  %v393 = vpop.f32.mrb[0].mxu0
  %v394 = vadd.f32 %v250, %v393
  %v395 = vpop.f32.mrb[0].mxu0
  %396 = vmatprep.mubr.bf16.mxu0 %v106
  %397 = vmatmul.mubr.bf16.gmra.mrb[0].mxu0 %v105
  %v398 = vpop.f32.mrb[0].mxu0
  %v399 = vadd.f32 %v250, %v398
  %v400 = vpop.f32.mrb[0].mxu0
  %v401 = vpop.f32.mrb[0].mxu0
  %v402 = vadd.f32 %v250, %v401
  %v403 = vpop.f32.mrb[0].mxu0
  %404 = vmatprep.mubr.bf16.mxu0 %v108
  %405 = vmatmul.mubr.bf16.gmra.mrb[0].mxu0 %v107
  %v406 = vpop.f32.mrb[0].mxu0
  %v407 = vadd.f32 %v250, %v406
  %v408 = vpop.f32.mrb[0].mxu0
  %v409 = vpop.f32.mrb[0].mxu0
  %v410 = vadd.f32 %v250, %v409
  %v411 = vpop.f32.mrb[0].mxu0
  %412 = vmatprep.mubr.bf16.mxu0 %v110
  %413 = vmatmul.mubr.bf16.gmra.mrb[0].mxu0 %v109
  %v414 = vpop.f32.mrb[0].mxu0
  %v415 = vadd.f32 %v250, %v414
  %v416 = vpop.f32.mrb[0].mxu0
  %v417 = vpop.f32.mrb[0].mxu0
  %v418 = vadd.f32 %v250, %v417
  %v419 = vpop.f32.mrb[0].mxu0
  %420 = vmatprep.mubr.bf16.mxu0 %v112
  %421 = vmatmul.mubr.bf16.gmra.mrb[0].mxu0 %v111
  %v422 = vpop.f32.mrb[0].mxu0
  %v423 = vadd.f32 %v250, %v422
  %v424 = vpop.f32.mrb[0].mxu0
  %v425 = vpop.f32.mrb[0].mxu0
  %v426 = vadd.f32 %v250, %v425
  %v427 = vpop.f32.mrb[0].mxu0
  %428 = vmatprep.mubr.bf16.mxu0 %v114
  %429 = vmatmul.mubr.bf16.gmra.mrb[0].mxu0 %v113
  %v430 = vpop.f32.mrb[0].mxu0
  %v431 = vadd.f32 %v250, %v430
  %v432 = vpop.f32.mrb[0].mxu0
  %v433 = vpop.f32.mrb[0].mxu0
  %v434 = vadd.f32 %v250, %v433
  %v435 = vpop.f32.mrb[0].mxu0
  %436 = vmatprep.mubr.bf16.mxu0 %v116
  %437 = vmatmul.mubr.bf16.gmra.mrb[0].mxu0 %v115
  %v438 = vpop.f32.mrb[0].mxu0
  %v439 = vadd.f32 %v250, %v438
  %v440 = vpop.f32.mrb[0].mxu0
  %v441 = vpop.f32.mrb[0].mxu0
  %v442 = vadd.f32 %v250, %v441
  %v443 = vpop.f32.mrb[0].mxu0
  %444 = vmatprep.mubr.bf16.mxu0 %v182
  %445 = vmatmul.mubr.bf16.gmra.mrb[0].mxu0 %v181
  %v446 = vpop.f32.mrb[0].mxu0
  %v447 = vadd.f32 %v250, %v446
  %v448 = vpop.f32.mrb[0].mxu0
  %v449 = vpop.f32.mrb[0].mxu0
  %v450 = vadd.f32 %v250, %v449
  %v451 = vpop.f32.mrb[0].mxu0
  %452 = vmatprep.mubr.bf16.mxu0 %v184
  %453 = vmatmul.mubr.bf16.gmra.mrb[0].mxu0 %v183
  %v454 = vpop.f32.mrb[0].mxu0
  %v455 = vadd.f32 %v250, %v454
  %v456 = vpop.f32.mrb[0].mxu0
  %v457 = vpop.f32.mrb[0].mxu0
  %v458 = vadd.f32 %v250, %v457
  %v459 = vpop.f32.mrb[0].mxu0
  %460 = vmatprep.mubr.bf16.mxu0 %v186
  %461 = vmatmul.mubr.bf16.gmra.mrb[0].mxu0 %v185
  %v462 = vpop.f32.mrb[0].mxu0
  %v463 = vadd.f32 %v250, %v462
  %v464 = vpop.f32.mrb[0].mxu0
  %v465 = vpop.f32.mrb[0].mxu0
  %v466 = vadd.f32 %v250, %v465
  %v467 = vpop.f32.mrb[0].mxu0
  %468 = vmatprep.mubr.bf16.mxu0 %v188
  %469 = vmatmul.mubr.bf16.gmra.mrb[0].mxu0 %v187
  %v470 = vpop.f32.mrb[0].mxu0
  %v471 = vadd.f32 %v250, %v470
  %v472 = vpop.f32.mrb[0].mxu0
  %v473 = vpop.f32.mrb[0].mxu0
  %v474 = vadd.f32 %v250, %v473
  %v475 = vpop.f32.mrb[0].mxu0
  %476 = vmatprep.mubr.bf16.mxu0 %v190
  %477 = vmatmul.mubr.bf16.gmra.mrb[0].mxu0 %v189
  %v478 = vpop.f32.mrb[0].mxu0
  %v479 = vadd.f32 %v250, %v478
  %v480 = vpop.f32.mrb[0].mxu0
  %v481 = vpop.f32.mrb[0].mxu0
  %v482 = vadd.f32 %v250, %v481
  %v483 = vpop.f32.mrb[0].mxu0
  %484 = vmatprep.mubr.bf16.mxu0 %v192
  %485 = vmatmul.mubr.bf16.gmra.mrb[0].mxu0 %v191
  %v486 = vpop.f32.mrb[0].mxu0
  %v487 = vadd.f32 %v250, %v486
  %v488 = vpop.f32.mrb[0].mxu0
  %v489 = vpop.f32.mrb[0].mxu0
  %v490 = vadd.f32 %v250, %v489
  %v491 = vpop.f32.mrb[0].mxu0
  %492 = vmatprep.mubr.bf16.mxu0 %v194
  %493 = vmatmul.mubr.bf16.gmra.mrb[0].mxu0 %v193
  %v494 = vpop.f32.mrb[0].mxu0
  %v495 = vadd.f32 %v250, %v494
  %v496 = vpop.f32.mrb[0].mxu0
  %v497 = vpop.f32.mrb[0].mxu0
  %v498 = vadd.f32 %v250, %v497
  %v499 = vpop.f32.mrb[0].mxu0
  %500 = vmatprep.mubr.bf16.mxu0 %v196
  %501 = vmatmul.mubr.bf16.gmra.mrb[0].mxu0 %v195
  %v502 = vpop.f32.mrb[0].mxu0
  %v503 = vadd.f32 %v250, %v502
  %v504 = vpop.f32.mrb[0].mxu0
  %v505 = vpop.f32.mrb[0].mxu0
  %v506 = vadd.f32 %v250, %v505
  %v507 = vpop.f32.mrb[0].mxu0
  %508 = vdwg.mxu0
  %v509 = vmul.f32 %v383, %v383
  %v510 = vmul.f32 %v386, %v386
  %v511 = vmul.f32 %v391, %v391
  %v512 = vmul.f32 %v394, %v394
  %v513 = vmul.f32 %v399, %v399
  %v514 = vmul.f32 %v402, %v402
  %v515 = vmul.f32 %v407, %v407
  %v516 = vmul.f32 %v410, %v410
  %v517 = vmul.f32 %v415, %v415
  %v518 = vmul.f32 %v418, %v418
  %v519 = vmul.f32 %v423, %v423
  %v520 = vmul.f32 %v426, %v426
  %v521 = vmul.f32 %v431, %v431
  %v522 = vmul.f32 %v434, %v434
  %v523 = vmul.f32 %v439, %v439
  %v524 = vmul.f32 %v442, %v442
  %v525 = vmul.f32 %v447, %v447
  %v526 = vmul.f32 %v450, %v450
  %v527 = vmul.f32 %v455, %v455
  %v528 = vmul.f32 %v458, %v458
  %v529 = vmul.f32 %v463, %v463
  %v530 = vmul.f32 %v466, %v466
  %v531 = vmul.f32 %v471, %v471
  %v532 = vmul.f32 %v474, %v474
  %v533 = vmul.f32 %v479, %v479
  %v534 = vmul.f32 %v482, %v482
  %v535 = vmul.f32 %v487, %v487
  %v536 = vmul.f32 %v490, %v490
  %v537 = vmul.f32 %v495, %v495
  %v538 = vmul.f32 %v498, %v498
  %v539 = vmul.f32 %v503, %v503
  %v540 = vmul.f32 %v506, %v506
  %v541 = vmul.f32 %v383, %v509
  %v542 = vmul.f32 %v386, %v510
  %v543 = vmul.f32 %v391, %v511
  %v544 = vmul.f32 %v394, %v512
  %v545 = vmul.f32 %v399, %v513
  %v546 = vmul.f32 %v402, %v514
  %v547 = vmul.f32 %v407, %v515
  %v548 = vmul.f32 %v410, %v516
  %v549 = vmul.f32 %v415, %v517
  %v550 = vmul.f32 %v418, %v518
  %v551 = vmul.f32 %v423, %v519
  %v552 = vmul.f32 %v426, %v520
  %v553 = vmul.f32 %v431, %v521
  %v554 = vmul.f32 %v434, %v522
  %v555 = vmul.f32 %v439, %v523
  %v556 = vmul.f32 %v442, %v524
  %v557 = vmul.f32 %v447, %v525
  %v558 = vmul.f32 %v450, %v526
  %v559 = vmul.f32 %v455, %v527
  %v560 = vmul.f32 %v458, %v528
  %v561 = vmul.f32 %v463, %v529
  %v562 = vmul.f32 %v466, %v530
  %v563 = vmul.f32 %v471, %v531
  %v564 = vmul.f32 %v474, %v532
  %v565 = vmul.f32 %v479, %v533
  %v566 = vmul.f32 %v482, %v534
  %v567 = vmul.f32 %v487, %v535
  %v568 = vmul.f32 %v490, %v536
  %v569 = vmul.f32 %v495, %v537
  %v570 = vmul.f32 %v498, %v538
  %v571 = vmul.f32 %v503, %v539
  %v572 = vmul.f32 %v506, %v540
  %v573 = vmul.f32 %v541, 0.044715
  %v574 = vmul.f32 %v542, 0.044715
  %v575 = vmul.f32 %v543, 0.044715
  %v576 = vmul.f32 %v544, 0.044715
  %v577 = vmul.f32 %v545, 0.044715
  %v578 = vmul.f32 %v546, 0.044715
  %v579 = vmul.f32 %v547, 0.044715
  %v580 = vmul.f32 %v548, 0.044715
  %v581 = vmul.f32 %v549, 0.044715
  %v582 = vmul.f32 %v550, 0.044715
  %v583 = vmul.f32 %v551, 0.044715
  %v584 = vmul.f32 %v552, 0.044715
  %v585 = vmul.f32 %v553, 0.044715
  %v586 = vmul.f32 %v554, 0.044715
  %v587 = vmul.f32 %v555, 0.044715
  %v588 = vmul.f32 %v556, 0.044715
  %v589 = vmul.f32 %v557, 0.044715
  %v590 = vmul.f32 %v558, 0.044715
  %v591 = vmul.f32 %v559, 0.044715
  %v592 = vmul.f32 %v560, 0.044715
  %v593 = vmul.f32 %v561, 0.044715
  %v594 = vmul.f32 %v562, 0.044715
  %v595 = vmul.f32 %v563, 0.044715
  %v596 = vmul.f32 %v564, 0.044715
  %v597 = vmul.f32 %v565, 0.044715
  %v598 = vmul.f32 %v566, 0.044715
  %v599 = vmul.f32 %v567, 0.044715
  %v600 = vmul.f32 %v568, 0.044715
  %v601 = vmul.f32 %v569, 0.044715
  %v602 = vmul.f32 %v570, 0.044715
  %v603 = vmul.f32 %v571, 0.044715
  %v604 = vmul.f32 %v572, 0.044715
  %v605 = vadd.f32 %v383, %v573
  %v606 = vadd.f32 %v386, %v574
  %v607 = vadd.f32 %v391, %v575
  %v608 = vadd.f32 %v394, %v576
  %v609 = vadd.f32 %v399, %v577
  %v610 = vadd.f32 %v402, %v578
  %v611 = vadd.f32 %v407, %v579
  %v612 = vadd.f32 %v410, %v580
  %v613 = vadd.f32 %v415, %v581
  %v614 = vadd.f32 %v418, %v582
  %v615 = vadd.f32 %v423, %v583
  %v616 = vadd.f32 %v426, %v584
  %v617 = vadd.f32 %v431, %v585
  %v618 = vadd.f32 %v434, %v586
  %v619 = vadd.f32 %v439, %v587
  %v620 = vadd.f32 %v442, %v588
  %v621 = vadd.f32 %v447, %v589
  %v622 = vadd.f32 %v450, %v590
  %v623 = vadd.f32 %v455, %v591
  %v624 = vadd.f32 %v458, %v592
  %v625 = vadd.f32 %v463, %v593
  %v626 = vadd.f32 %v466, %v594
  %v627 = vadd.f32 %v471, %v595
  %v628 = vadd.f32 %v474, %v596
  %v629 = vadd.f32 %v479, %v597
  %v630 = vadd.f32 %v482, %v598
  %v631 = vadd.f32 %v487, %v599
  %v632 = vadd.f32 %v490, %v600
  %v633 = vadd.f32 %v495, %v601
  %v634 = vadd.f32 %v498, %v602
  %v635 = vadd.f32 %v503, %v603
  %v636 = vadd.f32 %v506, %v604
  %v637 = vmul.f32 %v605, 0.7978846
  %v638 = vmul.f32 %v606, 0.7978846
  %v639 = vmul.f32 %v607, 0.7978846
  %v640 = vmul.f32 %v608, 0.7978846
  %v641 = vmul.f32 %v609, 0.7978846
  %v642 = vmul.f32 %v610, 0.7978846
  %v643 = vmul.f32 %v611, 0.7978846
  %v644 = vmul.f32 %v612, 0.7978846
  %v645 = vmul.f32 %v613, 0.7978846
  %v646 = vmul.f32 %v614, 0.7978846
  %v647 = vmul.f32 %v615, 0.7978846
  %v648 = vmul.f32 %v616, 0.7978846
  %v649 = vmul.f32 %v617, 0.7978846
  %v650 = vmul.f32 %v618, 0.7978846
  %v651 = vmul.f32 %v619, 0.7978846
  %v652 = vmul.f32 %v620, 0.7978846
  %v653 = vmul.f32 %v621, 0.7978846
  %v654 = vmul.f32 %v622, 0.7978846
  %v655 = vmul.f32 %v623, 0.7978846
  %v656 = vmul.f32 %v624, 0.7978846
  %v657 = vmul.f32 %v625, 0.7978846
  %v658 = vmul.f32 %v626, 0.7978846
  %v659 = vmul.f32 %v627, 0.7978846
  %v660 = vmul.f32 %v628, 0.7978846
  %v661 = vmul.f32 %v629, 0.7978846
  %v662 = vmul.f32 %v630, 0.7978846
  %v663 = vmul.f32 %v631, 0.7978846
  %v664 = vmul.f32 %v632, 0.7978846
  %v665 = vmul.f32 %v633, 0.7978846
  %v666 = vmul.f32 %v634, 0.7978846
  %v667 = vmul.f32 %v635, 0.7978846
  %v668 = vmul.f32 %v636, 0.7978846
  %v669 = vtanh.pop %v637
  %v670 = vtanh.pop %v638
  %v671 = vtanh.pop %v639
  %v672 = vtanh.pop %v640
  %v673 = vtanh.pop %v641
  %v674 = vtanh.pop %v642
  %v675 = vtanh.pop %v643
  %v676 = vtanh.pop %v644
  %v677 = vtanh.pop %v645
  %v678 = vtanh.pop %v646
  %v679 = vtanh.pop %v647
  %v680 = vtanh.pop %v648
  %v681 = vtanh.pop %v649
  %v682 = vtanh.pop %v650
  %v683 = vtanh.pop %v651
  %v684 = vtanh.pop %v652
  %v685 = vtanh.pop %v653
  %v686 = vtanh.pop %v654
  %v687 = vtanh.pop %v655
  %v688 = vtanh.pop %v656
  %v689 = vtanh.pop %v657
  %v690 = vtanh.pop %v658
  %v691 = vtanh.pop %v659
  %v692 = vtanh.pop %v660
  %v693 = vtanh.pop %v661
  %v694 = vtanh.pop %v662
  %v695 = vtanh.pop %v663
  %v696 = vtanh.pop %v664
  %v697 = vtanh.pop %v665
  %v698 = vtanh.pop %v666
  %v699 = vtanh.pop %v667
  %v700 = vtanh.pop %v668
  %v701 = vadd.f32 %v669, 1.0
  %v702 = vadd.f32 %v670, 1.0
  %v703 = vadd.f32 %v671, 1.0
  %v704 = vadd.f32 %v672, 1.0
  %v705 = vadd.f32 %v673, 1.0
  %v706 = vadd.f32 %v674, 1.0
  %v707 = vadd.f32 %v675, 1.0
  %v708 = vadd.f32 %v676, 1.0
  %v709 = vadd.f32 %v677, 1.0
  %v710 = vadd.f32 %v678, 1.0
  %v711 = vadd.f32 %v679, 1.0
  %v712 = vadd.f32 %v680, 1.0
  %v713 = vadd.f32 %v681, 1.0
  %v714 = vadd.f32 %v682, 1.0
  %v715 = vadd.f32 %v683, 1.0
  %v716 = vadd.f32 %v684, 1.0
  %v717 = vadd.f32 %v685, 1.0
  %v718 = vadd.f32 %v686, 1.0
  %v719 = vadd.f32 %v687, 1.0
  %v720 = vadd.f32 %v688, 1.0
  %v721 = vadd.f32 %v689, 1.0
  %v722 = vadd.f32 %v690, 1.0
  %v723 = vadd.f32 %v691, 1.0
  %v724 = vadd.f32 %v692, 1.0
  %v725 = vadd.f32 %v693, 1.0
  %v726 = vadd.f32 %v694, 1.0
  %v727 = vadd.f32 %v695, 1.0
  %v728 = vadd.f32 %v696, 1.0
  %v729 = vadd.f32 %v697, 1.0
  %v730 = vadd.f32 %v698, 1.0
  %v731 = vadd.f32 %v699, 1.0
  %v732 = vadd.f32 %v700, 1.0
  %v733 = vmul.f32 %v701, 0.5
  %v734 = vmul.f32 %v702, 0.5
  %v735 = vmul.f32 %v703, 0.5
  %v736 = vmul.f32 %v704, 0.5
  %v737 = vmul.f32 %v705, 0.5
  %v738 = vmul.f32 %v706, 0.5
  %v739 = vmul.f32 %v707, 0.5
  %v740 = vmul.f32 %v708, 0.5
  %v741 = vmul.f32 %v709, 0.5
  %v742 = vmul.f32 %v710, 0.5
  %v743 = vmul.f32 %v711, 0.5
  %v744 = vmul.f32 %v712, 0.5
  %v745 = vmul.f32 %v713, 0.5
  %v746 = vmul.f32 %v714, 0.5
  %v747 = vmul.f32 %v715, 0.5
  %v748 = vmul.f32 %v716, 0.5
  %v749 = vmul.f32 %v717, 0.5
  %v750 = vmul.f32 %v718, 0.5
  %v751 = vmul.f32 %v719, 0.5
  %v752 = vmul.f32 %v720, 0.5
  %v753 = vmul.f32 %v721, 0.5
  %v754 = vmul.f32 %v722, 0.5
  %v755 = vmul.f32 %v723, 0.5
  %v756 = vmul.f32 %v724, 0.5
  %v757 = vmul.f32 %v725, 0.5
  %v758 = vmul.f32 %v726, 0.5
  %v759 = vmul.f32 %v727, 0.5
  %v760 = vmul.f32 %v728, 0.5
  %v761 = vmul.f32 %v729, 0.5
  %v762 = vmul.f32 %v730, 0.5
  %v763 = vmul.f32 %v731, 0.5
  %v764 = vmul.f32 %v732, 0.5
  %v765 = vmul.f32 %v383, %v733
  %v766 = vmul.f32 %v386, %v734
  %v767 = vmul.f32 %v391, %v735
  %v768 = vmul.f32 %v394, %v736
  %v769 = vmul.f32 %v399, %v737
  %v770 = vmul.f32 %v402, %v738
  %v771 = vmul.f32 %v407, %v739
  %v772 = vmul.f32 %v410, %v740
  %v773 = vmul.f32 %v415, %v741
  %v774 = vmul.f32 %v418, %v742
  %v775 = vmul.f32 %v423, %v743
  %v776 = vmul.f32 %v426, %v744
  %v777 = vmul.f32 %v431, %v745
  %v778 = vmul.f32 %v434, %v746
  %v779 = vmul.f32 %v439, %v747
  %v780 = vmul.f32 %v442, %v748
  %v781 = vmul.f32 %v447, %v749
  %v782 = vmul.f32 %v450, %v750
  %v783 = vmul.f32 %v455, %v751
  %v784 = vmul.f32 %v458, %v752
  %v785 = vmul.f32 %v463, %v753
  %v786 = vmul.f32 %v466, %v754
  %v787 = vmul.f32 %v471, %v755
  %v788 = vmul.f32 %v474, %v756
  %v789 = vmul.f32 %v479, %v757
  %v790 = vmul.f32 %v482, %v758
  %v791 = vmul.f32 %v487, %v759
  %v792 = vmul.f32 %v490, %v760
  %v793 = vmul.f32 %v495, %v761
  %v794 = vmul.f32 %v498, %v762
  %v795 = vmul.f32 %v503, %v763
  %v796 = vmul.f32 %v506, %v764
  %v797 = vadd.f32 %v765, %v766
  %v798 = vrot.slane %v797, 4
  %v799 = vadd.f32 %v797, %v798
  %v800 = vrot.slane %v799, 2
  %v801 = vadd.f32 %v799, %v800
  %v802 = vrot.slane %v801, 1
  %v803 = vadd.f32 %v801, %v802
  %v804 = vadd.f32 %v767, %v768
  %v805 = vrot.slane %v804, 4
  %v806 = vadd.f32 %v804, %v805
  %v807 = vrot.slane %v806, 2
  %v808 = vadd.f32 %v806, %v807
  %v809 = vrot.slane %v808, 1
  %v810 = vadd.f32 %v808, %v809
  %v811 = vadd.f32 %v769, %v770
  %v812 = vrot.slane %v811, 4
  %v813 = vadd.f32 %v811, %v812
  %v814 = vrot.slane %v813, 2
  %v815 = vadd.f32 %v813, %v814
  %v816 = vrot.slane %v815, 1
  %v817 = vadd.f32 %v815, %v816
  %v818 = vadd.f32 %v771, %v772
  %v819 = vrot.slane %v818, 4
  %v820 = vadd.f32 %v818, %v819
  %v821 = vrot.slane %v820, 2
  %v822 = vadd.f32 %v820, %v821
  %v823 = vrot.slane %v822, 1
  %v824 = vadd.f32 %v822, %v823
  %v825 = vadd.f32 %v773, %v774
  %v826 = vrot.slane %v825, 4
  %v827 = vadd.f32 %v825, %v826
  %v828 = vrot.slane %v827, 2
  %v829 = vadd.f32 %v827, %v828
  %v830 = vrot.slane %v829, 1
  %v831 = vadd.f32 %v829, %v830
  %v832 = vadd.f32 %v775, %v776
  %v833 = vrot.slane %v832, 4
  %v834 = vadd.f32 %v832, %v833
  %v835 = vrot.slane %v834, 2
  %v836 = vadd.f32 %v834, %v835
  %v837 = vrot.slane %v836, 1
  %v838 = vadd.f32 %v836, %v837
  %v839 = vadd.f32 %v777, %v778
  %v840 = vrot.slane %v839, 4
  %v841 = vadd.f32 %v839, %v840
  %v842 = vrot.slane %v841, 2
  %v843 = vadd.f32 %v841, %v842
  %v844 = vrot.slane %v843, 1
  %v845 = vadd.f32 %v843, %v844
  %v846 = vadd.f32 %v779, %v780
  %v847 = vrot.slane %v846, 4
  %v848 = vadd.f32 %v846, %v847
  %v849 = vrot.slane %v848, 2
  %v850 = vadd.f32 %v848, %v849
  %v851 = vrot.slane %v850, 1
  %v852 = vadd.f32 %v850, %v851
  %v853 = vadd.f32 %v781, %v782
  %v854 = vrot.slane %v853, 4
  %v855 = vadd.f32 %v853, %v854
  %v856 = vrot.slane %v855, 2
  %v857 = vadd.f32 %v855, %v856
  %v858 = vrot.slane %v857, 1
  %v859 = vadd.f32 %v857, %v858
  %v860 = vadd.f32 %v783, %v784
  %v861 = vrot.slane %v860, 4
  %v862 = vadd.f32 %v860, %v861
  %v863 = vrot.slane %v862, 2
  %v864 = vadd.f32 %v862, %v863
  %v865 = vrot.slane %v864, 1
  %v866 = vadd.f32 %v864, %v865
  %v867 = vadd.f32 %v785, %v786
  %v868 = vrot.slane %v867, 4
  %v869 = vadd.f32 %v867, %v868
  %v870 = vrot.slane %v869, 2
  %v871 = vadd.f32 %v869, %v870
  %v872 = vrot.slane %v871, 1
  %v873 = vadd.f32 %v871, %v872
  %v874 = vadd.f32 %v787, %v788
  %v875 = vrot.slane %v874, 4
  %v876 = vadd.f32 %v874, %v875
  %v877 = vrot.slane %v876, 2
  %v878 = vadd.f32 %v876, %v877
  %v879 = vrot.slane %v878, 1
  %v880 = vadd.f32 %v878, %v879
  %v881 = vadd.f32 %v789, %v790
  %v882 = vrot.slane %v881, 4
  %v883 = vadd.f32 %v881, %v882
  %v884 = vrot.slane %v883, 2
  %v885 = vadd.f32 %v883, %v884
  %v886 = vrot.slane %v885, 1
  %v887 = vadd.f32 %v885, %v886
  %v888 = vadd.f32 %v791, %v792
  %v889 = vrot.slane %v888, 4
  %v890 = vadd.f32 %v888, %v889
  %v891 = vrot.slane %v890, 2
  %v892 = vadd.f32 %v890, %v891
  %v893 = vrot.slane %v892, 1
  %v894 = vadd.f32 %v892, %v893
  %v895 = vadd.f32 %v793, %v794
  %v896 = vrot.slane %v895, 4
  %v897 = vadd.f32 %v895, %v896
  %v898 = vrot.slane %v897, 2
  %v899 = vadd.f32 %v897, %v898
  %v900 = vrot.slane %v899, 1
  %v901 = vadd.f32 %v899, %v900
  %v902 = vadd.f32 %v795, %v796
  %v903 = vrot.slane %v902, 4
  %v904 = vadd.f32 %v902, %v903
  %v905 = vrot.slane %v904, 2
  %v906 = vadd.f32 %v904, %v905
  %v907 = vrot.slane %v906, 1
  %v908 = vadd.f32 %v906, %v907
  %v909 = vrcp.pop 16.0
  %v910 = vmul.f32 %v803, %v909
  %v911 = vmul.f32 %v810, %v909
  %v912 = vmul.f32 %v817, %v909
  %v913 = vmul.f32 %v824, %v909
  %v914 = vmul.f32 %v831, %v909
  %v915 = vmul.f32 %v838, %v909
  %v916 = vmul.f32 %v845, %v909
  %v917 = vmul.f32 %v852, %v909
  %v918 = vmul.f32 %v859, %v909
  %v919 = vmul.f32 %v866, %v909
  %v920 = vmul.f32 %v873, %v909
  %v921 = vmul.f32 %v880, %v909
  %v922 = vmul.f32 %v887, %v909
  %v923 = vmul.f32 %v894, %v909
  %v924 = vmul.f32 %v901, %v909
  %v925 = vmul.f32 %v908, %v909
  %v926 = vpack.c.bf16 %v910, %v910
  %v927 = vpack.c.bf16 %v911, %v911
  %v928 = vpack.c.bf16 %v912, %v912
  %v929 = vpack.c.bf16 %v913, %v913
  %v930 = vpack.c.bf16 %v914, %v914
  %v931 = vpack.c.bf16 %v915, %v915
  %v932 = vpack.c.bf16 %v916, %v916
  %v933 = vpack.c.bf16 %v917, %v917
  %v934 = vpack.c.bf16 %v918, %v918
  %v935 = vpack.c.bf16 %v919, %v919
  %v936 = vpack.c.bf16 %v920, %v920
  %v937 = vpack.c.bf16 %v921, %v921
  %v938 = vpack.c.bf16 %v922, %v922
  %v939 = vpack.c.bf16 %v923, %v923
  %v940 = vpack.c.bf16 %v924, %v924
  %v941 = vpack.c.bf16 %v925, %v925
  %v942 = vld [vmem:[%s4] sm:$0xf]
  %v943 = vld [vmem:[%s4 + $0x4] sm:$0xf]
  %v944 = vld [vmem:[%s4 + $0x8] sm:$0xf]
  %v945 = vld [vmem:[%s4 + $0xc] sm:$0xf]
  %v946 = vld [vmem:[%s4 + $0x10] sm:$0xf]
  %v947 = vld [vmem:[%s4 + $0x14] sm:$0xf]
  %v948 = vld [vmem:[%s4 + $0x18] sm:$0xf]
  %v949 = vld [vmem:[%s4 + $0x1c] sm:$0xf]
  %v950 = vld [vmem:[%s4 + $0x20] sm:$0xf]
  %v951 = vld [vmem:[%s4 + $0x24] sm:$0xf]
  %v952 = vld [vmem:[%s4 + $0x28] sm:$0xf]
  %v953 = vld [vmem:[%s4 + $0x2c] sm:$0xf]
  %v954 = vld [vmem:[%s4 + $0x30] sm:$0xf]
  %v955 = vld [vmem:[%s4 + $0x34] sm:$0xf]
  %v956 = vld [vmem:[%s4 + $0x38] sm:$0xf]
  %v957 = vld [vmem:[%s4 + $0x3c] sm:$0xf]
  %v974 = vunpack.c.l.b16 %v926
  %v975 = vunpack.c.l.b16 %v927
  %v976 = vunpack.c.l.b16 %v928
  %v977 = vunpack.c.l.b16 %v929
  %v978 = vunpack.c.l.b16 %v930
  %v979 = vunpack.c.l.b16 %v931
  %v980 = vunpack.c.l.b16 %v932
  %v981 = vunpack.c.l.b16 %v933
  %v982 = vunpack.c.l.b16 %v934
  %v983 = vunpack.c.l.b16 %v935
  %v984 = vunpack.c.l.b16 %v936
  %v985 = vunpack.c.l.b16 %v937
  %v986 = vunpack.c.l.b16 %v938
  %v987 = vunpack.c.l.b16 %v939
  %v988 = vunpack.c.l.b16 %v940
  %v989 = vunpack.c.l.b16 %v941
  %vm990 = vcmask 1041409
  %v991 = vsel %vm990, %v975, %v974
  %vm992 = vcmask 1042434
  %v993 = vsel %vm992, %v976, %v991
  %vm994 = vcmask 1043459
  %v995 = vsel %vm994, %v977, %v993
  %vm996 = vcmask 1044484
  %v997 = vsel %vm996, %v978, %v995
  %vm998 = vcmask 1045509
  %v999 = vsel %vm998, %v979, %v997
  %vm1000 = vcmask 1046534
  %v1001 = vsel %vm1000, %v980, %v999
  %vm1002 = vcmask 1047559
  %v1003 = vsel %vm1002, %v981, %v1001
  %v1004 = vsel %vm990, %v983, %v982
  %v1005 = vsel %vm992, %v984, %v1004
  %v1006 = vsel %vm994, %v985, %v1005
  %v1007 = vsel %vm996, %v986, %v1006
  %v1008 = vsel %vm998, %v987, %v1007
  %v1009 = vsel %vm1000, %v988, %v1008
  %v1010 = vsel %vm1002, %v989, %v1009
  %v1011 = vpack.c.b16 %v1010, %v1003
  %v1029 = vunpack.c.l.b16 %v942
  %v1030 = vunpack.c.l.b16 %v943
  %v1031 = vunpack.c.l.b16 %v944
  %v1032 = vunpack.c.l.b16 %v945
  %v1033 = vunpack.c.l.b16 %v946
  %v1034 = vunpack.c.l.b16 %v947
  %v1035 = vunpack.c.l.b16 %v948
  %v1036 = vunpack.c.l.b16 %v949
  %v1037 = vunpack.c.l.b16 %v950
  %v1038 = vunpack.c.l.b16 %v951
  %v1039 = vunpack.c.l.b16 %v952
  %v1040 = vunpack.c.l.b16 %v953
  %v1041 = vunpack.c.l.b16 %v954
  %v1042 = vunpack.c.l.b16 %v955
  %v1043 = vunpack.c.l.b16 %v956
  %v1044 = vunpack.c.l.b16 %v957
  %v1045 = vpack.c.b16 %v1030, %v1029
  %v1046 = vpack.c.b16 %v1032, %v1031
  %v1047 = vpack.c.b16 %v1034, %v1033
  %v1048 = vpack.c.b16 %v1036, %v1035
  %v1049 = vpack.c.b16 %v1038, %v1037
  %v1050 = vpack.c.b16 %v1040, %v1039
  %v1051 = vpack.c.b16 %v1042, %v1041
  %v1052 = vpack.c.b16 %v1044, %v1043
  %1061 = vmatprep.subr.bf16.mxu0 0
  %1062 = vmatpush1.bf16.msra.mxu0 %v1045
  %1063 = vmatprep.subr.bf16.mxu0 0
  %1064 = vmatpush1.bf16.msra.mxu0 %v1046
  %1065 = vmatprep.subr.bf16.mxu0 0
  %1066 = vmatpush1.bf16.msra.mxu0 %v1047
  %1067 = vmatprep.subr.bf16.mxu0 0
  %1068 = vmatpush1.bf16.msra.mxu0 %v1048
  %1069 = vmatprep.subr.bf16.mxu0 0
  %1070 = vmatpush1.bf16.msra.mxu0 %v1049
  %1071 = vmatprep.subr.bf16.mxu0 0
  %1072 = vmatpush1.bf16.msra.mxu0 %v1050
  %1073 = vmatprep.subr.bf16.mxu0 0
  %1074 = vmatpush1.bf16.msra.mxu0 %v1051
  %1075 = vmatprep.subr.bf16.mxu0 0
  %1076 = vmatpush1.bf16.msra.mxu0 %v1052
  %1077 = vmatprep.subr.bf16.mxu0 0
  %1078 = vmatpush1.bf16.msra.mxu0 0
  %1079 = vmatprep.subr.bf16.mxu0 0
  %1080 = vmatpush1.bf16.msra.mxu0 0
  %1081 = vmatprep.subr.bf16.mxu0 0
  %1082 = vmatpush1.bf16.msra.mxu0 0
  %1083 = vmatprep.subr.bf16.mxu0 0
  %1084 = vmatpush1.bf16.msra.mxu0 0
  %1085 = vmatprep.subr.bf16.mxu0 0
  %1086 = vmatpush1.bf16.msra.mxu0 0
  %1087 = vmatprep.subr.bf16.mxu0 0
  %1088 = vmatpush1.bf16.msra.mxu0 0
  %1089 = vmatprep.subr.bf16.mxu0 0
  %1090 = vmatpush1.bf16.msra.mxu0 0
  %1091 = vmatprep.subr.bf16.mxu0 0
  %1092 = vmatpush1.bf16.msra.mxu0 0
  %1093 = vmatprep.mubr.bf16.mxu0 0
  %1094 = vmatmul.mubr.bf16.gmra.mrb[0].mxu0 %v1011
  %v1095 = vpop.f32.mrb[0].mxu0
  %v1096 = vadd.f32 0.0, %v1095
  %v1097 = vpop.f32.mrb[0].mxu0
  %v1098 = vpop.f32.mrb[0].mxu0
  %v1099 = vadd.f32 0.0, %v1098
  %v1100 = vpop.f32.mrb[0].mxu0
  %1101 = vdwg.mxu0
  %v1102 = vmul.f32 %v1096, %v1096
  %v1103 = vmul.f32 %v1099, %v1099
  %1104 = vadd.xlane.f32.xlu0 %v1102
  %v1105 = vpop.xlane.xlu0 %1104
  %1106 = vadd.xlane.f32.xlu0 %v1103
  %v1107 = vpop.xlane.xlu0 %1106
  %v1108 = vmax.f32 %v1105, 1e-16
  %v1109 = vmax.f32 %v1107, 1e-16
  %v1110 = vrsqrt.pop %v1108
  %v1111 = vrsqrt.pop %v1109
  %v1112 = vmul.f32 %v1096, %v1110
  %v1113 = vmul.f32 %v1099, %v1111
  %v1114 = vmul.f32 %v1112, %v1113
  %1115 = vadd.xlane.f32.xlu0 %v1114
  %v1116 = vpop.xlane.xlu0 %1115
  %v1117 = vsub.f32 1.0, %v1116
  %vm1118 = vcmask 7168
  %1119 = vst.msk [vmem:[%s5] sm:$0xff] %vm1118, %v1117
  // Predicated region
  $region22: #{dreamsim_feature_loss.1} parent=0 // pred_check
    _
  $region23: #{dreamsim_feature_loss.1} parent=0 // pred_check_branch
    %1121 = sbr.rel (0) target = $region25
  $region24: #{dreamsim_feature_loss.1} parent=0 // pred_region
    _
  $region25: #{dreamsim_feature_loss.1} parent=0 // pred_fallthru
    _
  // Predicated region
  $region26: #{dreamsim_feature_loss.1} parent=0 // pred_check
    _
  $region27: #{dreamsim_feature_loss.1} parent=0 // pred_check_branch
    %1123 = sbr.rel (0) target = $region29
  $region28: #{dreamsim_feature_loss.1} parent=0 // pred_region
    _
  $region29: #{dreamsim_feature_loss.1} parent=0 // pred_fallthru
    _

</llo_original>
